<compile_context>
chip_gen: v6e
topology: v6e:2x2x1
jax: 0.10.0
libtpu: 0.0.40
codegen_flags: <defaults>
</compile_context>

<pallas_src>
import jax
import jax.numpy as jnp
from jax.experimental import pallas as pl
from jax.experimental.pallas import tpu as pltpu


def _attention_kernel(x_ref, m_ref, w_ref, wb_ref, v_ref, vb_ref, z_ref, a_ref):
    bb, t, h = x_ref.shape

    x = x_ref[...]                                    # (BB, T, H)
    x2 = x.reshape(bb * t, h)                         # merge leading dims (cheap)

    # Hidden projection: one large (BB*T, H) @ (H, H) MXU matmul.
    hdn = jnp.tanh(
        jnp.dot(x2, w_ref[...], preferred_element_type=jnp.float32) + wb_ref[...]
    )                                                 # (BB*T, H)

    # v-projection: VPU multiply + XLU lane reduction instead of an N=1 matmul.
    logits = jnp.sum(hdn * v_ref[...], axis=-1)       # (BB*T,)
    logits = logits.reshape(bb, t) + vb_ref[0]        # (BB, T), scalar bias from SMEM

    u = jnp.exp(logits) * m_ref[...]                  # masked exp, lane-dense (BB, T)
    s = jnp.sum(u, axis=-1, keepdims=True)            # (BB, 1) per-batch sum over T

    inv = pl.reciprocal(s, approx=True)               # EUP slot (free next to exp/tanh)
    inv = inv * (2.0 - s * inv)                       # one Newton step -> ~f32 exact
    a = u * inv                                       # (BB, T)

    a_ref[...] = a                                    # lane-dense store
    z_ref[...] = x * a[:, :, None]                    # (BB, T, H)


def _pick_batch_block(B, T, H, target_block_bytes=2 << 20):
    """Batch rows per grid step: whole batch if tiny, otherwise a multiple of 8
    (sublane tiling of the (BB, T) mask/a blocks) giving ~target-size x/z tiles."""
    if B <= 8:
        return B
    rows = max(8, (target_block_bytes // (T * H * 4)) // 8 * 8)
    return int(min(rows, -(-B // 8) * 8))


def attention_forward(inputs, mask, W_w, W_b, v_w, v_b):
    """inputs: (B, T, H); mask: (B, T).
    W_w: (H, H) torch nn.Linear weight; W_b: (H,); v_w: (1, H); v_b: (1,).
    Returns (z, a) with z: (B, T, H), a: (B, T)."""
    B, T, H = inputs.shape

    x = inputs.astype(jnp.float32)
    m = mask.astype(jnp.float32)
    Wt = W_w.T.astype(jnp.float32)                    # (H, H): y = x @ Wt + b
    Wb = W_b.astype(jnp.float32).reshape(1, H)
    vr = v_w.astype(jnp.float32).reshape(1, H)        # row vector (VPU multiplier)
    vb = v_b.astype(jnp.float32).reshape(1)           # scalar -> SMEM

    bb = _pick_batch_block(B, T, H)
    Bp = pl.cdiv(B, bb) * bb
    if Bp != B:                                       # pad batch to a block multiple
        pad = Bp - B
        x = jnp.concatenate([x, jnp.zeros((pad, T, H), jnp.float32)], axis=0)
        m = jnp.concatenate([m, jnp.ones((pad, T), jnp.float32)], axis=0)

    grid = (Bp // bb,)

    z, a = pl.pallas_call(
        _attention_kernel,
        out_shape=(
            jax.ShapeDtypeStruct((Bp, T, H), jnp.float32),
            jax.ShapeDtypeStruct((Bp, T), jnp.float32),
        ),
        grid_spec=pltpu.PrefetchScalarGridSpec(
            num_scalar_prefetch=0,
            grid=grid,
            in_specs=[
                pl.BlockSpec((bb, T, H), lambda i: (i, 0, 0)),       # inputs
                pl.BlockSpec((bb, T), lambda i: (i, 0)),             # mask (lane-dense)
                pl.BlockSpec((H, H), lambda i: (0, 0)),              # W^T
                pl.BlockSpec((1, H), lambda i: (0, 0)),              # W bias
                pl.BlockSpec((1, H), lambda i: (0, 0)),              # v row
                pl.BlockSpec(memory_space=pltpu.MemorySpace.SMEM),   # v bias (scalar)
            ],
            out_specs=[
                pl.BlockSpec((bb, T, H), lambda i: (i, 0, 0)),       # z
                pl.BlockSpec((bb, T), lambda i: (i, 0)),             # a (lane-dense)
            ],
        ),
        compiler_params=pltpu.CompilerParams(
            dimension_semantics=("parallel",),       # shards batch blocks across TCs
            vmem_limit_bytes=32 * 1024 * 1024,       # safe on v5e/v6e/v7x
        ),
    )(x, m, Wt, Wb, vr, vb)

    if Bp != B:
        z = z[:B]
        a = a[:B]
    return z, a


if __name__ == "__main__":
    B, T, H = 2, 8, 32  # batch, seq, hidden_size

    key = jax.random.PRNGKey(0)
    k_x, k_w, k_wb, k_v, k_vb = jax.random.split(key, 5)

    # Deterministic synthetic parameters (shapes match nn.Linear(H, H) / nn.Linear(H, 1))
    bound = 1.0 / jnp.sqrt(H)
    W_w = jax.random.uniform(k_w, (H, H), jnp.float32, -bound, bound)
    W_b = jax.random.uniform(k_wb, (H,), jnp.float32, -bound, bound)
    v_w = jax.random.uniform(k_v, (1, H), jnp.float32, -bound, bound)
    v_b = jax.random.uniform(k_vb, (1,), jnp.float32, -bound, bound)

    # Example inputs: (B, T, H) activations and a (B, T) padding mask
    x = jax.random.normal(k_x, (B, T, H), jnp.float32)
    mask = jnp.array([[1, 1, 1, 1, 1, 1, 0, 0],
                      [1, 1, 1, 1, 0, 0, 0, 0]], dtype=jnp.float32)

    z, a = attention_forward(x, mask, W_w, W_b, v_w, v_b)
    jax.block_until_ready((z, a))

    # Pure-JAX reference (same math as the PyTorch forward)
    u_ref = jnp.exp(jnp.tanh(x @ W_w.T + W_b) @ v_w.T + v_b)
    u_ref = mask[..., None] * u_ref
    a_ref = u_ref / jnp.sum(u_ref, axis=1, keepdims=True)
    z_ref = x * a_ref

    assert jnp.allclose(z, z_ref, atol=1e-5, rtol=1e-5), "z mismatch"
    assert jnp.allclose(a, a_ref[..., 0], atol=1e-5, rtol=1e-5), "a mismatch"

    print("KERNEL_OK")
</pallas_src>

<mosaic_0001>
module attributes {stable_mosaic.version = 11 : i64} {
  func.func @_attention_kernel(%arg0: i32, %arg1: memref<2x8x32xf32, #tpu.memory_space<vmem>>, %arg2: memref<2x8xf32, #tpu.memory_space<vmem>>, %arg3: memref<32x32xf32, #tpu.memory_space<vmem>>, %arg4: memref<1x32xf32, #tpu.memory_space<vmem>>, %arg5: memref<1x32xf32, #tpu.memory_space<vmem>>, %arg6: memref<1xf32, #tpu.memory_space<smem>>, %arg7: memref<2x8x32xf32, #tpu.memory_space<vmem>>, %arg8: memref<2x8xf32, #tpu.memory_space<vmem>>) attributes {dimension_semantics = [#tpu.dimension_semantics<parallel>], iteration_bounds = array<i64: 1>, scalar_prefetch = 0 : i64, scratch_operands = 0 : i64, tpu.core_type = #tpu.core_type<tc>, window_params = [{transform_indices = @transform_0, window_bounds = array<i64: 2, 8, 32>}, {transform_indices = @transform_1, window_bounds = array<i64: 2, 8>}, {pipeline_mode = #tpu.pipeline_mode<synchronous>, transform_indices = @transform_2, window_bounds = array<i64: 32, 32>}, {pipeline_mode = #tpu.pipeline_mode<synchronous>, transform_indices = @transform_3, window_bounds = array<i64: 1, 32>}, {pipeline_mode = #tpu.pipeline_mode<synchronous>, transform_indices = @transform_4, window_bounds = array<i64: 1, 32>}, {transform_indices = @transform_5, window_bounds = array<i64: 1>}, {transform_indices = @transform_6, window_bounds = array<i64: 2, 8, 32>}, {transform_indices = @transform_7, window_bounds = array<i64: 2, 8>}]} {
    %c0 = arith.constant 0 : index
    %c0_0 = arith.constant 0 : index
    %c0_1 = arith.constant 0 : index
    %0 = vector.load %arg1[%c0, %c0_0, %c0_1] : memref<2x8x32xf32, #tpu.memory_space<vmem>>, vector<2x8x32xf32>
    %1 = vector.shape_cast %0 : vector<2x8x32xf32> to vector<16x32xf32>
    %c0_2 = arith.constant 0 : index
    %c0_3 = arith.constant 0 : index
    %2 = vector.load %arg3[%c0_2, %c0_3] : memref<32x32xf32, #tpu.memory_space<vmem>>, vector<32x32xf32>
    %cst = arith.constant dense<0.000000e+00> : vector<16x32xf32>
    %3 = tpu.matmul %1, %2, %cst {dimension_numbers = #tpu.dot_dimension_numbers<[1], [0], [0], [1], [0, 0, 1, 1], [], []>} : vector<16x32xf32>, vector<32x32xf32>, vector<16x32xf32> -> vector<16x32xf32>
    %c0_4 = arith.constant 0 : index
    %c0_5 = arith.constant 0 : index
    %4 = vector.load %arg4[%c0_4, %c0_5] : memref<1x32xf32, #tpu.memory_space<vmem>>, vector<1x32xf32>
    %5 = vector.broadcast %4 : vector<1x32xf32> to vector<16x32xf32>
    %6 = arith.addf %3, %5 : vector<16x32xf32>
    %7 = math.tanh %6 : vector<16x32xf32>
    %c0_6 = arith.constant 0 : index
    %c0_7 = arith.constant 0 : index
    %8 = vector.load %arg5[%c0_6, %c0_7] : memref<1x32xf32, #tpu.memory_space<vmem>>, vector<1x32xf32>
    %9 = vector.broadcast %8 : vector<1x32xf32> to vector<16x32xf32>
    %10 = arith.mulf %7, %9 : vector<16x32xf32>
    %cst_8 = arith.constant dense<0.000000e+00> : vector<16xf32>
    %11 = vector.multi_reduction <add>, %10, %cst_8 [1] : vector<16x32xf32> to vector<16xf32>
    %12 = vector.shape_cast %11 : vector<16xf32> to vector<2x8xf32>
    %c0_9 = arith.constant 0 : index
    %13 = memref.load %arg6[%c0_9] : memref<1xf32, #tpu.memory_space<smem>>
    %14 = vector.broadcast %13 : f32 to vector<2x8xf32>
    %15 = arith.addf %12, %14 : vector<2x8xf32>
    %16 = math.exp %15 : vector<2x8xf32>
    %c0_10 = arith.constant 0 : index
    %c0_11 = arith.constant 0 : index
    %17 = vector.load %arg2[%c0_10, %c0_11] : memref<2x8xf32, #tpu.memory_space<vmem>>, vector<2x8xf32>
    %18 = arith.mulf %16, %17 : vector<2x8xf32>
    %cst_12 = arith.constant dense<0.000000e+00> : vector<2xf32>
    %19 = vector.multi_reduction <add>, %18, %cst_12 [1] : vector<2x8xf32> to vector<2xf32>
    %20 = vector.shape_cast %19 : vector<2xf32> to vector<2x1xf32>
    %21 = tpu.reciprocal %20 {approx = true} : vector<2x1xf32> -> vector<2x1xf32>
    %22 = arith.mulf %20, %21 : vector<2x1xf32>
    %cst_13 = arith.constant 2.000000e+00 : f32
    %23 = vector.broadcast %cst_13 : f32 to vector<2x1xf32>
    %24 = arith.subf %23, %22 : vector<2x1xf32>
    %25 = arith.mulf %21, %24 : vector<2x1xf32>
    %26 = vector.broadcast %25 : vector<2x1xf32> to vector<2x8xf32>
    %27 = arith.mulf %18, %26 : vector<2x8xf32>
    %c0_14 = arith.constant 0 : index
    %c0_15 = arith.constant 0 : index
    %28 = vector.load %arg8[%c0_14, %c0_15] : memref<2x8xf32, #tpu.memory_space<vmem>>, vector<2x8xf32>
    tpu.vector_store %arg8[%c0_14, %c0_15], %27 {strides = array<i32>} : memref<2x8xf32, #tpu.memory_space<vmem>>, vector<2x8xf32>,
    %29 = vector.shape_cast %27 : vector<2x8xf32> to vector<2x8x1xf32>
    %30 = vector.broadcast %29 : vector<2x8x1xf32> to vector<2x8x32xf32>
    %31 = arith.mulf %0, %30 : vector<2x8x32xf32>
    %c0_16 = arith.constant 0 : index
    %c0_17 = arith.constant 0 : index
    %c0_18 = arith.constant 0 : index
    %32 = vector.load %arg7[%c0_16, %c0_17, %c0_18] : memref<2x8x32xf32, #tpu.memory_space<vmem>>, vector<2x8x32xf32>
    tpu.vector_store %arg7[%c0_16, %c0_17, %c0_18], %31 {strides = array<i32>} : memref<2x8x32xf32, #tpu.memory_space<vmem>>, vector<2x8x32xf32>,
    return
  }
  func.func @transform_0(%arg0: i32) -> (i32, i32, i32) {
    %c0_i32 = arith.constant 0 : i32
    %c0_i32_0 = arith.constant 0 : i32
    %c0_i32_1 = arith.constant 0 : i32
    return %arg0, %c0_i32, %c0_i32_0 : i32, i32, i32
  }
  func.func @transform_1(%arg0: i32) -> (i32, i32) {
    %c0_i32 = arith.constant 0 : i32
    %c0_i32_0 = arith.constant 0 : i32
    return %arg0, %c0_i32 : i32, i32
  }
  func.func @transform_2(%arg0: i32) -> (i32, i32) {
    %c0_i32 = arith.constant 0 : i32
    %c0_i32_0 = arith.constant 0 : i32
    %c0_i32_1 = arith.constant 0 : i32
    return %c0_i32, %c0_i32_0 : i32, i32
  }
  func.func @transform_3(%arg0: i32) -> (i32, i32) {
    %c0_i32 = arith.constant 0 : i32
    %c0_i32_0 = arith.constant 0 : i32
    %c0_i32_1 = arith.constant 0 : i32
    return %c0_i32, %c0_i32_0 : i32, i32
  }
  func.func @transform_4(%arg0: i32) -> (i32, i32) {
    %c0_i32 = arith.constant 0 : i32
    %c0_i32_0 = arith.constant 0 : i32
    %c0_i32_1 = arith.constant 0 : i32
    return %c0_i32, %c0_i32_0 : i32, i32
  }
  func.func @transform_5(%arg0: i32) -> i32 {
    %c0_i32 = arith.constant 0 : i32
    %c0_i32_0 = arith.constant 0 : i32
    return %c0_i32 : i32
  }
  func.func @transform_6(%arg0: i32) -> (i32, i32, i32) {
    %c0_i32 = arith.constant 0 : i32
    %c0_i32_0 = arith.constant 0 : i32
    %c0_i32_1 = arith.constant 0 : i32
    return %arg0, %c0_i32, %c0_i32_0 : i32, i32, i32
  }
  func.func @transform_7(%arg0: i32) -> (i32, i32) {
    %c0_i32 = arith.constant 0 : i32
    %c0_i32_0 = arith.constant 0 : i32
    return %arg0, %c0_i32 : i32, i32
  }
}

</mosaic_0001>

<llo_original>
// kernel: tpu_custom_call.1
$region0: #{tpu_custom_call.1}
  #allocation0 [shape = 'u32[]', space=smem, size = 0x4, offset = 0x4, fixed_abs, tag = 'smem constant byte address 0x4 - core index']
  #allocation1 [shape = 'u32[144,128]{1,0:T(1,128)}', space=vmem, size = 0x12000, scoped, tag = 'internal scratch']
  #allocation2 [shape = 'f32[1]{0:T(128)S(6)}', space=smem, size = 0x200, scoped, tag = 'scoped memory for tpu_custom_call.1']
  %s0 = inlined_call_operand.hbm [shape: f32[2,8,32], index: 0, kind: input, shape index: {}]
  %s1 = inlined_call_operand.vmem [shape: f32[2,8], index: 1, kind: input, shape index: {}]
  %s2 = inlined_call_operand.hbm [shape: f32[32,32], index: 2, kind: input, shape index: {}]
  %s3 = inlined_call_operand.vmem [shape: f32[1,32], index: 3, kind: input, shape index: {}]
  %s4 = inlined_call_operand.vmem [shape: f32[1,32], index: 4, kind: input, shape index: {}]
  %s5 = inlined_call_operand.<no memory space> [shape: f32[1], index: 5, kind: input, shape index: {}]
  %s6 = inlined_call_operand.hbm [shape: f32[2,8,32], index: 6, kind: output, shape index: {0}]
  %s7 = inlined_call_operand.hbm [shape: f32[2,8], index: 7, kind: output, shape index: {1}]
  %8 = xla_tuple %s6, %s7
  %s9 = sld [smem:[#allocation0]]
  $region50: #{tpu_custom_call.1} parent=0
    _
  %s11 = ssub.s32 1, %s9
  %s12 = scalar_select 0, %s11, %s9
  %13 = sst [smem:[#allocation2]] %s5
  $region1: #{tpu_custom_call.1} parent=0
    #allocation3 [shape = 'u8[8192]{0}', space=vmem, size = 0x2000, scoped, tag = 'input window, operand 0, single buffered']
    #allocation4 [shape = 's32[1]{0}', space=sflag, size = 0x4, scoped, tag = 'scoped memory for tpu_custom_call.1']
    #allocation5 [shape = 's32[1]{0}', space=sflag, size = 0x4, scoped, tag = 'scoped memory for tpu_custom_call.1']
    #allocation6 [shape = 'u8[16384]{0}', space=vmem, size = 0x4000, scoped, tag = 'input window, operand 2, single buffered']
    #allocation7 [shape = 's32[1]{0}', space=sflag, size = 0x4, scoped, tag = 'scoped memory for tpu_custom_call.1']
    #allocation8 [shape = 'u8[8192]{0}', space=vmem, size = 0x2000, scoped, tag = 'output window, operand 0, single buffered']
    #allocation9 [shape = 'u8[1024]{0}', space=vmem, size = 0x400, scoped, tag = 'output window, operand 1, single buffered']
    #allocation10 [shape = 's32[1]{0}', space=sflag, size = 0x4, scoped, tag = 'scoped memory for tpu_custom_call.1']
    %14 = vsyncpa [#allocation4], 0
    %15 = vsyncpa [#allocation7], 0
    %16 = vsyncpa [#allocation5], 0
    %17 = vsyncpa [#allocation10], 0
    // Predicated region
    $region2: #{tpu_custom_call.1} parent=1 // pred_check
      _
    $region3: #{tpu_custom_call.1} parent=1 // pred_check_branch
      %19 = sbr.rel (0) target = $region5
    $region4: #{tpu_custom_call.1} parent=1 // pred_region
      %s21 = ssub.s32 256, 256
      %22 = vsyncadd [#allocation4], %s21
      %s23 = sshll.u32 [#allocation3], 4
      %s24 = int_to_ptr.vmem [resolvable:$true] %s23
      %29 = dma.hbm_to_vmem [thread:$0]  %s0, 256, %s24, [#allocation4], 128, 128, 8
    $region5: #{tpu_custom_call.1} parent=1 // pred_fallthru
      _
    // Predicated region
    $region6: #{tpu_custom_call.1} parent=1 // pred_check
      _
    $region7: #{tpu_custom_call.1} parent=1 // pred_check_branch
      %31 = sbr.rel (0) target = $region9
    $region8: #{tpu_custom_call.1} parent=1 // pred_region
      _
    $region9: #{tpu_custom_call.1} parent=1 // pred_fallthru
      _
    // Predicated region
    $region10: #{tpu_custom_call.1} parent=1 // pred_check
      _
    $region11: #{tpu_custom_call.1} parent=1 // pred_check_branch
      %33 = sbr.rel (0) target = $region13
    $region12: #{tpu_custom_call.1} parent=1 // pred_region
      %s35 = ssub.s32 512, 512
      %36 = vsyncadd [#allocation7], %s35
      %s37 = sshll.u32 [#allocation6], 4
      %s38 = int_to_ptr.vmem [resolvable:$true] %s37
      %43 = dma.hbm_to_vmem [thread:$0]  %s2, 512, %s38, [#allocation7], 128, 128, 8
    $region13: #{tpu_custom_call.1} parent=1 // pred_fallthru
      _
    // Predicated region
    $region14: #{tpu_custom_call.1} parent=1 // pred_check
      _
    $region15: #{tpu_custom_call.1} parent=1 // pred_check_branch
      %45 = sbr.rel (0) target = $region17
    $region16: #{tpu_custom_call.1} parent=1 // pred_region
      _
    $region17: #{tpu_custom_call.1} parent=1 // pred_fallthru
      _
    // Predicated region
    $region18: #{tpu_custom_call.1} parent=1 // pred_check
      _
    $region19: #{tpu_custom_call.1} parent=1 // pred_check_branch
      %47 = sbr.rel (0) target = $region21
    $region20: #{tpu_custom_call.1} parent=1 // pred_region
      _
    $region21: #{tpu_custom_call.1} parent=1 // pred_fallthru
      _
    // Predicated region
    $region22: #{tpu_custom_call.1} parent=1 // pred_check
      _
    $region23: #{tpu_custom_call.1} parent=1 // pred_check_branch
      %49 = sbr.rel (0) target = $region25
    $region24: #{tpu_custom_call.1} parent=1 // pred_region
      _
    $region25: #{tpu_custom_call.1} parent=1 // pred_fallthru
      _
    // Predicated region
    $region26: #{tpu_custom_call.1} parent=1 // pred_check
      _
    $region27: #{tpu_custom_call.1} parent=1 // pred_check_branch
      %51 = sbr.rel (0) target = $region29
    $region28: #{tpu_custom_call.1} parent=1 // pred_region
      %52 = dma.done [#allocation4], 256
    $region29: #{tpu_custom_call.1} parent=1 // pred_fallthru
      _
    // Predicated region
    $region30: #{tpu_custom_call.1} parent=1 // pred_check
      _
    $region31: #{tpu_custom_call.1} parent=1 // pred_check_branch
      %54 = sbr.rel (0) target = $region33
    $region32: #{tpu_custom_call.1} parent=1 // pred_region
      %55 = dma.done [#allocation7], 512
    $region33: #{tpu_custom_call.1} parent=1 // pred_fallthru
      _
    %v56 = vld [vmem:[#allocation3] sm:$0xff]
    %v57 = vld [vmem:[#allocation3 + $0x8] sm:$0xff]
    %v58 = vld [vmem:[#allocation6] sm:$0xff]
    %v59 = vld [vmem:[#allocation6 + $0x8] sm:$0xff]
    %v60 = vld [vmem:[#allocation6 + $0x10] sm:$0xff]
    %v61 = vld [vmem:[#allocation6 + $0x18] sm:$0xff]
    %v62 = vld [vmem:[%s3] sm:$0x1]
    %v64 = vlaneseq
    %v65 = vshrl.u32 %v64, 7
    %v66 = vsub.s32 0, %v65
    %v67 = vrot.slane %v62, %v66
    %vm69 = vcmask 261120
    %v71 = vsel %vm69, %v56, 0
    %v74 = vsel %vm69, %v57, 0
    %76 = vmatprep.subr.mxu0 0.0
    %77 = vmatpush1.msra.mxu0 0.0
    %78 = vmatprep.subr.mxu0 0.0
    %79 = vmatpush1.msra.mxu0 0.0
    %80 = vmatprep.subr.mxu0 0.0
    %81 = vmatpush1.msra.mxu0 0.0
    %82 = vmatprep.subr.mxu0 0.0
    %83 = vmatpush1.msra.mxu0 0.0
    %84 = vmatprep.subr.mxu0 0.0
    %85 = vmatpush1.msra.mxu0 0.0
    %86 = vmatprep.subr.mxu0 0.0
    %87 = vmatpush1.msra.mxu0 0.0
    %88 = vmatprep.subr.mxu0 0.0
    %89 = vmatpush1.msra.mxu0 0.0
    %90 = vmatprep.subr.mxu0 0.0
    %91 = vmatpush1.msra.mxu0 0.0
    %92 = vmatprep.subr.mxu0 0.0
    %93 = vmatpush1.msra.mxu0 0.0
    %94 = vmatprep.subr.mxu0 0.0
    %95 = vmatpush1.msra.mxu0 0.0
    %96 = vmatprep.subr.mxu0 0.0
    %97 = vmatpush1.msra.mxu0 0.0
    %98 = vmatprep.subr.mxu0 0.0
    %99 = vmatpush1.msra.mxu0 0.0
    %100 = vmatprep.subr.mxu0 0.0
    %101 = vmatpush1.msra.mxu0 %v61
    %102 = vmatprep.subr.mxu0 0.0
    %103 = vmatpush1.msra.mxu0 %v60
    %104 = vmatprep.subr.mxu0 0.0
    %105 = vmatpush1.msra.mxu0 %v59
    %106 = vmatprep.subr.mxu0 0.0
    %107 = vmatpush1.msra.mxu0 %v58
    %108 = vmatprep.subr.mxu0 0.0
    %109 = vmatpush2.msra.mxu0 0.0
    %110 = vmatprep.subr.mxu0 0.0
    %111 = vmatpush2.msra.mxu0 0.0
    %112 = vmatprep.subr.mxu0 0.0
    %113 = vmatpush2.msra.mxu0 0.0
    %114 = vmatprep.subr.mxu0 0.0
    %115 = vmatpush2.msra.mxu0 0.0
    %116 = vmatprep.subr.mxu0 0.0
    %117 = vmatpush2.msra.mxu0 0.0
    %118 = vmatprep.subr.mxu0 0.0
    %119 = vmatpush2.msra.mxu0 0.0
    %120 = vmatprep.subr.mxu0 0.0
    %121 = vmatpush2.msra.mxu0 0.0
    %122 = vmatprep.subr.mxu0 0.0
    %123 = vmatpush2.msra.mxu0 0.0
    %124 = vmatprep.subr.mxu0 0.0
    %125 = vmatpush2.msra.mxu0 0.0
    %126 = vmatprep.subr.mxu0 0.0
    %127 = vmatpush2.msra.mxu0 0.0
    %128 = vmatprep.subr.mxu0 0.0
    %129 = vmatpush2.msra.mxu0 0.0
    %130 = vmatprep.subr.mxu0 0.0
    %131 = vmatpush2.msra.mxu0 0.0
    %132 = vmatprep.subr.mxu0 0.0
    %133 = vmatpush2.msra.mxu0 0.0
    %134 = vmatprep.subr.mxu0 0.0
    %135 = vmatpush2.msra.mxu0 0.0
    %136 = vmatprep.subr.mxu0 0.0
    %137 = vmatpush2.msra.mxu0 0.0
    %138 = vmatprep.subr.mxu0 0.0
    %139 = vmatpush2.msra.mxu0 0.0
    %140 = vmatprep.mubr.f32.mxu0 0.0
    %141 = vmatmul.mubr.f32.gmra.mxu0 %v71
    %v142 = vpop.f32.mrf.mxu0
    %v143 = vadd.f32 %v67, %v142
    %v144 = vpop.f32.mrf.mxu0
    %145 = vmatprep.mubr.f32.mxu0 0.0
    %146 = vmatmul.mubr.f32.gmra.mxu0 %v74
    %v147 = vpop.f32.mrf.mxu0
    %v148 = vadd.f32 %v67, %v147
    %v149 = vpop.f32.mrf.mxu0
    %150 = vdwg.mxu0
    %v151 = vtanh.pop %v143
    %v152 = vtanh.pop %v148
    %v153 = vld [vmem:[%s4] sm:$0x1]
    %v155 = vlaneseq
    %v156 = vshrl.u32 %v155, 7
    %v157 = vsub.s32 0, %v156
    %v158 = vrot.slane %v153, %v157
    %v160 = vmul.f32 %v151, %v158
    %v161 = vmul.f32 %v152, %v158
    %v162 = vsel %vm69, %v160, 0.0
    %163 = vadd.xlane.f32.xlu0 %v162
    %v164 = vpop.xlane.xlu0 %163
    %v165 = vsel %vm69, %v161, 0.0
    %166 = vadd.xlane.f32.xlu0 %v165
    %v167 = vpop.xlane.xlu0 %166
    %s168 = sld [smem:[#allocation2]]
    %v169 = vstv %s168
    %v170 = vadd.f32 %v164, %v169
    %v171 = vadd.f32 %v167, %v169
    %v172 = vmul.f32 %v170, 1.442695
    %v173 = vpow.pop %v172
    %v174 = vmul.f32 %v171, 1.442695
    %v175 = vpow.pop %v174
    %v176 = vld [vmem:[%s1] sm:$0x3]
    %v178 = vlaneseq
    %v179 = vshrl.u32 %v178, 7
    %v180 = vsub.s32 0, %v179
    %v181 = vrot.slane %v176, %v180
    %183 = vbcast.lane.b32.xlu0 %v181, 256
    %v184 = vpop.permute.xlu0 %183
    %v185 = vlaneseq
    %v186 = vshrl.u32 %v185, 7
    %v187 = vsub.s32 1, %v186
    %v188 = vrot.slane %v176, %v187
    %190 = vbcast.lane.b32.xlu0 %v188, 256
    %v191 = vpop.permute.xlu0 %190
    %v194 = vmul.f32 %v173, %v184
    %v195 = vmul.f32 %v175, %v191
    %198 = vset.pattern.permute.xlu0 0
    %199 = vperm.xlu0 %198, %v194
    %v200 = vpop.permute.xlu0 %199
    %201 = vset.pattern.permute.xlu0 0
    %202 = vperm.xlu0 %201, %v195
    %v203 = vpop.permute.xlu0 %202
    %v204 = vlaneseq
    %v205 = vand.u32 %v204, 127
    %v206 = vlaneseq
    %v207 = vshrl.u32 %v206, 7
    %v208 = vsub.s32 %v205, %v207
    %v209 = vrot.slane %v200, %v208
    %v210 = vlaneseq
    %v211 = vshrl.u32 %v210, 7
    %v212 = vsub.s32 %v205, %v211
    %v213 = vrot.slane %v203, %v212
    %vm214 = vcmask 1041409
    %v215 = vsel %vm214, %v213, %v209
    %vm217 = vcmask 58368
    %v218 = vsel %vm217, %v215, 0.0
    %219 = vadd.xlane.f32.xlu0 %v218
    %v220 = vpop.xlane.xlu0 %219
    %v221 = vrcp.pop %v220
    %v222 = vmul.f32 %v220, %v221
    %v223 = vsub.f32 2.0, %v222
    %v224 = vmul.f32 %v221, %v223
    %v226 = vlaneseq
    %v227 = vshrl.u32 %v226, 7
    %v228 = vsub.s32 0, %v227
    %v229 = vrot.slane %v224, %v228
    %v230 = vlaneseq
    %v231 = vshrl.u32 %v230, 7
    %v232 = vsub.s32 1, %v231
    %v233 = vrot.slane %v224, %v232
    %v236 = vmul.f32 %v194, %v229
    %v237 = vmul.f32 %v195, %v233
    %240 = vset.pattern.permute.xlu0 0
    %241 = vperm.xlu0 %240, %v236
    %v242 = vpop.permute.xlu0 %241
    %243 = vset.pattern.permute.xlu0 0
    %244 = vperm.xlu0 %243, %v237
    %v245 = vpop.permute.xlu0 %244
    %v246 = vlaneseq
    %v247 = vshrl.u32 %v246, 7
    %v248 = vsub.s32 %v205, %v247
    %v249 = vrot.slane %v242, %v248
    %v250 = vlaneseq
    %v251 = vshrl.u32 %v250, 7
    %v252 = vsub.s32 %v205, %v251
    %v253 = vrot.slane %v245, %v252
    %v254 = vsel %vm214, %v253, %v249
    %256 = vst.msk [vmem:[#allocation9] sm:$0x3] %vm217, %v254
    %v259 = vmul.f32 %v56, %v242
    %v260 = vmul.f32 %v57, %v245
    %261 = vst.msk [vmem:[#allocation8] sm:$0xff] %vm69, %v259
    %262 = vst.msk [vmem:[#allocation8 + $0x8] sm:$0xff] %vm69, %v260
    // Predicated region
    $region34: #{tpu_custom_call.1} parent=1 // pred_check
      _
    $region35: #{tpu_custom_call.1} parent=1 // pred_check_branch
      %264 = sbr.rel (0) target = $region37
    $region36: #{tpu_custom_call.1} parent=1 // pred_region
      %s266 = ssub.s32 256, 256
      %267 = vsyncadd [#allocation5], %s266
      %s268 = sshll.u32 [#allocation8], 4
      %s269 = int_to_ptr.vmem [resolvable:$true] %s268
      %274 = dma.vmem_to_hbm [thread:$0]  %s269, 256, %s6, [#allocation5], 128, 128, 8
    $region37: #{tpu_custom_call.1} parent=1 // pred_fallthru
      _
    // Predicated region
    $region38: #{tpu_custom_call.1} parent=1 // pred_check
      _
    $region39: #{tpu_custom_call.1} parent=1 // pred_check_branch
      %276 = sbr.rel (0) target = $region41
    $region40: #{tpu_custom_call.1} parent=1 // pred_region
      %s278 = ssub.s32 32, 32
      %279 = vsyncadd [#allocation10], %s278
      %s281 = sshll.u32 [#allocation9], 4
      %s282 = int_to_ptr.vmem [resolvable:$true] %s281
      %284 = dma.vmem_to_hbm [thread:$0]  %s282, 32, %s7, [#allocation10]
    $region41: #{tpu_custom_call.1} parent=1 // pred_fallthru
      _
    // Predicated region
    $region42: #{tpu_custom_call.1} parent=1 // pred_check
      _
    $region43: #{tpu_custom_call.1} parent=1 // pred_check_branch
      %286 = sbr.rel (0) target = $region45
    $region44: #{tpu_custom_call.1} parent=1 // pred_region
      %287 = dma.done [#allocation5], 256
    $region45: #{tpu_custom_call.1} parent=1 // pred_fallthru
      _
    // Predicated region
    $region46: #{tpu_custom_call.1} parent=1 // pred_check
      _
    $region47: #{tpu_custom_call.1} parent=1 // pred_check_branch
      %289 = sbr.rel (0) target = $region49
    $region48: #{tpu_custom_call.1} parent=1 // pred_region
      %290 = dma.done [#allocation10], 32
    $region49: #{tpu_custom_call.1} parent=1 // pred_fallthru
      _
    %291 = vsyncpa [#allocation4], 1
    %292 = vsyncpa [#allocation7], 1
    %293 = vsyncpa [#allocation5], 1
    %294 = vsyncpa [#allocation10], 1

</llo_original>
